<compile_context>
chip_gen: v6e
topology: v6e:2x2x1
jax: 0.10.0
libtpu: 0.0.40
codegen_flags: <defaults>
</compile_context>

<pallas_src>
import functools

import jax
import jax.numpy as jnp
from jax.experimental import pallas as pl
from jax.experimental.pallas import tpu as pltpu


def _nn_scaling_kernel(*refs, n_hidden, sigmoid_max):
    """Fused MLP forward, batch on the lane axis.

    refs = (x_ref,
            w0, b0, ..., w_{n_hidden-1}, b_{n_hidden-1},   # hidden layers
            wz, bz,                                        # last layer rows [:out_dim]
            we, be,                                        # last layer row  [out_dim]
            out_z_ref, eps_ref)

    x_ref : [in_dim, TB]          (batch on lanes)
    wN    : PyTorch layout [out_features, in_features]
    bN    : [out_features, 1]     (broadcasts across lanes)
    out_z : [out_dim, TB]
    eps   : [1, TB] = sigmoid(last row) * sigmoid_max
    """
    x_ref = refs[0]
    out_z_ref, eps_ref = refs[-2], refs[-1]
    wrefs = refs[1:-2]

    z = x_ref[...]
    for l in range(n_hidden):
        w = wrefs[2 * l][...]
        b = wrefs[2 * l + 1][...]
        z = jnp.maximum(
            jnp.dot(w, z, preferred_element_type=jnp.float32) + b, 0.0)

    wz, bz = wrefs[2 * n_hidden][...], wrefs[2 * n_hidden + 1][...]
    we, be = wrefs[2 * n_hidden + 2][...], wrefs[2 * n_hidden + 3][...]

    out_z_ref[...] = (
        jnp.dot(wz, z, preferred_element_type=jnp.float32) + bz
    ).astype(out_z_ref.dtype)

    # Gate only the eps row: sigmoid runs on a single [1, TB] row.
    eps_lin = jnp.dot(we, z, preferred_element_type=jnp.float32) + be
    eps_ref[...] = (jax.nn.sigmoid(eps_lin) * sigmoid_max).astype(eps_ref.dtype)


def nn_scaling_forward_t(xT, params, *, out_dim, sigmoid_max=1.0,
                         batch_tile=32768):
    """Transposed-layout forward (no wrapper HBM passes).

    xT: [in_dim, B].  Returns (out_zT [out_dim, B], epsT [1, B]).
    `params` is the PyTorch-layout tuple (w0, b0, ..., w_last, b_last) with
    w_last of shape [out_dim + 1, h] (joint=True only).
    """
    in_dim, B = xT.shape
    assert len(params) % 2 == 0 and len(params) >= 4
    n_hidden = len(params) // 2 - 1
    w_last, b_last = params[-2], params[-1]
    assert w_last.shape[0] == out_dim + 1, "only joint=True is implemented"

    # Split the last Linear: rows [:out_dim] -> out_z, row [out_dim] -> eps.
    # (Tiny [out_dim+1, h] arrays; negligible one-time work outside the kernel.)
    wz, we = w_last[:out_dim], w_last[out_dim:out_dim + 1]
    bz, be = b_last[:out_dim].reshape(-1, 1), b_last[out_dim:].reshape(1, 1)

    # Hidden-layer weights; biases as columns so they broadcast across lanes.
    flat = []
    for l in range(n_hidden):
        flat.append(params[2 * l])
        flat.append(params[2 * l + 1].reshape(-1, 1))
    flat += [wz, bz, we, be]

    # Batch tiling: big lane-dense tiles amortize the ~0.35 us per-step
    # overhead; >= 2 balanced tiles when large enough so v7x's 2 TCs both work.
    batch_tile = max(int(batch_tile), 128)
    if B <= 256:
        TB = B                                    # single full-array block
    else:
        n_tiles = max(2, pl.cdiv(B, batch_tile))
        TB = min(batch_tile, pl.cdiv(pl.cdiv(B, n_tiles), 128) * 128)
    grid = (pl.cdiv(B, TB),)                      # partial tail block is masked

    kernel = functools.partial(
        _nn_scaling_kernel, n_hidden=n_hidden, sigmoid_max=float(sigmoid_max))

    # Weights/biases: constant index_map -> stay resident in VMEM across grid.
    const = lambda a: pl.BlockSpec(a.shape, lambda i: (0, 0))
    in_specs = [pl.BlockSpec((in_dim, TB), lambda i: (0, i))]
    in_specs += [const(a) for a in flat]

    # Double-buffered x + out_z + eps, sublane-padded to 16/16/8 rows of f32.
    vmem_budget = 2 * (16 + 16 + 8) * TB * 4 + (1 << 20)
    vmem_limit = int(min(max(vmem_budget, 32 << 20), 48 << 20))

    out_zT, epsT = pl.pallas_call(
        kernel,
        grid=grid,
        in_specs=in_specs,
        out_specs=[
            pl.BlockSpec((out_dim, TB), lambda i: (0, i)),
            pl.BlockSpec((1, TB), lambda i: (0, i)),
        ],
        out_shape=[
            jax.ShapeDtypeStruct((out_dim, B), xT.dtype),
            jax.ShapeDtypeStruct((1, B), xT.dtype),
        ],
        compiler_params=pltpu.CompilerParams(
            dimension_semantics=("parallel",),
            vmem_limit_bytes=vmem_limit),
    )(xT, *flat)
    return out_zT, epsT


def nn_scaling_forward(x, params, *, out_dim, sigmoid_max=1.0,
                       batch_tile=32768):
    """PyTorch-interface forward: x [B, in_dim] -> (out_z [B, out_dim], eps [B, 1]).

    The only wrapper-side HBM passes left are the boundary transposes; callers
    that can produce/consume the [feature, batch] layout should use
    nn_scaling_forward_t directly (zero wrapper traffic).
    """
    out_zT, epsT = nn_scaling_forward_t(
        x.T, params, out_dim=out_dim, sigmoid_max=sigmoid_max,
        batch_tile=batch_tile)
    return out_zT.T, epsT.T


def init_params(key, in_dim, hidden_dims, out_dim, init=0.4, joint=True):
    """Synthetic init mirroring the PyTorch module's shapes.

    Weights kept in PyTorch layout [out_features, in_features]:
      uniform(-init, init) (torch.nn.init.uniform_(a=-init, b=init)).
    Biases: uniform(-1/sqrt(fan_in), 1/sqrt(fan_in)) (nn.Linear default).
    """
    last = out_dim + 1 if joint else out_dim
    dims = [in_dim] + list(hidden_dims) + [last]
    params = []
    for fan_in, fan_out in zip(dims[:-1], dims[1:]):
        key, kw, kb = jax.random.split(key, 3)
        w = jax.random.uniform(kw, (fan_out, fan_in), jnp.float32,
                               minval=-init, maxval=init)
        bound = 1.0 / jnp.sqrt(float(fan_in))
        b = jax.random.uniform(kb, (fan_out,), jnp.float32,
                               minval=-bound, maxval=bound)
        params.extend([w, b])
    return tuple(params)


def reference_forward(x, params, *, out_dim, sigmoid_max=1.0):
    """Plain-JAX reference (PyTorch-layout weights)."""
    n_hidden = len(params) // 2 - 1
    z = x
    for l in range(n_hidden):
        w, b = params[2 * l], params[2 * l + 1]
        z = jnp.maximum(z @ w.T + b, 0.0)
    w, b = params[-2], params[-1]
    z = z @ w.T + b
    out_z = z[:, :out_dim]
    eps = jax.nn.sigmoid(z[:, out_dim:out_dim + 1]) * sigmoid_max
    return out_z, eps


if __name__ == "__main__":
    in_dim, hidden_dims, out_dim = 10, [5, 5], 10
    sigmoid_max = 1.0

    key = jax.random.PRNGKey(0)
    key, kp = jax.random.split(key)
    params = init_params(kp, in_dim, hidden_dims, out_dim, init=0.4, joint=True)

    # Case 1: small batch (single grid step, full-array blocks), PyTorch-style
    # [batch, feature] interface.
    key, kx1 = jax.random.split(key)
    x_small = jax.random.normal(kx1, (8, in_dim), dtype=jnp.float32)
    out_z, eps = nn_scaling_forward(x_small, params, out_dim=out_dim,
                                    sigmoid_max=sigmoid_max)
    jax.block_until_ready((out_z, eps))
    ref_z, ref_eps = reference_forward(x_small, params, out_dim=out_dim,
                                       sigmoid_max=sigmoid_max)
    assert out_z.shape == (8, out_dim) and eps.shape == (8, 1)
    assert jnp.allclose(out_z, ref_z, atol=1e-5, rtol=1e-5)
    assert jnp.allclose(eps, ref_eps, atol=1e-5, rtol=1e-5)

    # Case 2: batch large enough to exercise >= 2 balanced tiles plus a
    # masked partial trailing block (no jnp.pad, no post-slice), called via
    # the zero-overhead transposed boundary.
    key, kx2 = jax.random.split(key)
    x_big = jax.random.normal(kx2, (300, in_dim), dtype=jnp.float32)
    out_zT, epsT = nn_scaling_forward_t(x_big.T, params, out_dim=out_dim,
                                        sigmoid_max=sigmoid_max)
    jax.block_until_ready((out_zT, epsT))
    ref_z2, ref_eps2 = reference_forward(x_big, params, out_dim=out_dim,
                                         sigmoid_max=sigmoid_max)
    assert out_zT.shape == (out_dim, 300) and epsT.shape == (1, 300)
    assert jnp.allclose(out_zT.T, ref_z2, atol=1e-5, rtol=1e-5)
    assert jnp.allclose(epsT.T, ref_eps2, atol=1e-5, rtol=1e-5)

    print("KERNEL_OK")
</pallas_src>

<mosaic_0001>
module attributes {stable_mosaic.version = 11 : i64} {
  func.func @_nn_scaling_kernel(%arg0: i32, %arg1: memref<10x8xf32, #tpu.memory_space<vmem>>, %arg2: memref<5x10xf32, #tpu.memory_space<vmem>>, %arg3: memref<5x1xf32, #tpu.memory_space<vmem>>, %arg4: memref<5x5xf32, #tpu.memory_space<vmem>>, %arg5: memref<5x1xf32, #tpu.memory_space<vmem>>, %arg6: memref<10x5xf32, #tpu.memory_space<vmem>>, %arg7: memref<10x1xf32, #tpu.memory_space<vmem>>, %arg8: memref<1x5xf32, #tpu.memory_space<vmem>>, %arg9: memref<1x1xf32, #tpu.memory_space<vmem>>, %arg10: memref<10x8xf32, #tpu.memory_space<vmem>>, %arg11: memref<1x8xf32, #tpu.memory_space<vmem>>) attributes {dimension_semantics = [#tpu.dimension_semantics<parallel>], iteration_bounds = array<i64: 1>, scalar_prefetch = 0 : i64, scratch_operands = 0 : i64, tpu.core_type = #tpu.core_type<tc>, window_params = [{transform_indices = @transform_0, window_bounds = array<i64: 10, 8>}, {pipeline_mode = #tpu.pipeline_mode<synchronous>, transform_indices = @transform_1, window_bounds = array<i64: 5, 10>}, {pipeline_mode = #tpu.pipeline_mode<synchronous>, transform_indices = @transform_2, window_bounds = array<i64: 5, 1>}, {pipeline_mode = #tpu.pipeline_mode<synchronous>, transform_indices = @transform_3, window_bounds = array<i64: 5, 5>}, {pipeline_mode = #tpu.pipeline_mode<synchronous>, transform_indices = @transform_4, window_bounds = array<i64: 5, 1>}, {pipeline_mode = #tpu.pipeline_mode<synchronous>, transform_indices = @transform_5, window_bounds = array<i64: 10, 5>}, {pipeline_mode = #tpu.pipeline_mode<synchronous>, transform_indices = @transform_6, window_bounds = array<i64: 10, 1>}, {pipeline_mode = #tpu.pipeline_mode<synchronous>, transform_indices = @transform_7, window_bounds = array<i64: 1, 5>}, {pipeline_mode = #tpu.pipeline_mode<synchronous>, transform_indices = @transform_8, window_bounds = array<i64: 1, 1>}, {transform_indices = @transform_9, window_bounds = array<i64: 10, 8>}, {transform_indices = @transform_10, window_bounds = array<i64: 1, 8>}]} {
    %c0 = arith.constant 0 : index
    %c0_0 = arith.constant 0 : index
    %0 = vector.load %arg1[%c0, %c0_0] : memref<10x8xf32, #tpu.memory_space<vmem>>, vector<10x8xf32>
    %c0_1 = arith.constant 0 : index
    %c0_2 = arith.constant 0 : index
    %1 = vector.load %arg2[%c0_1, %c0_2] : memref<5x10xf32, #tpu.memory_space<vmem>>, vector<5x10xf32>
    %c0_3 = arith.constant 0 : index
    %c0_4 = arith.constant 0 : index
    %2 = vector.load %arg3[%c0_3, %c0_4] : memref<5x1xf32, #tpu.memory_space<vmem>>, vector<5x1xf32>
    %cst = arith.constant dense<0.000000e+00> : vector<5x8xf32>
    %3 = tpu.matmul %1, %0, %cst {dimension_numbers = #tpu.dot_dimension_numbers<[1], [0], [0], [1], [0, 0, 1, 1], [], []>} : vector<5x10xf32>, vector<10x8xf32>, vector<5x8xf32> -> vector<5x8xf32>
    %4 = vector.broadcast %2 : vector<5x1xf32> to vector<5x8xf32>
    %5 = arith.addf %3, %4 : vector<5x8xf32>
    %cst_5 = arith.constant 0.000000e+00 : f32
    %6 = vector.broadcast %cst_5 : f32 to vector<5x8xf32>
    %7 = arith.maximumf %5, %6 : vector<5x8xf32>
    %c0_6 = arith.constant 0 : index
    %c0_7 = arith.constant 0 : index
    %8 = vector.load %arg4[%c0_6, %c0_7] : memref<5x5xf32, #tpu.memory_space<vmem>>, vector<5x5xf32>
    %c0_8 = arith.constant 0 : index
    %c0_9 = arith.constant 0 : index
    %9 = vector.load %arg5[%c0_8, %c0_9] : memref<5x1xf32, #tpu.memory_space<vmem>>, vector<5x1xf32>
    %cst_10 = arith.constant dense<0.000000e+00> : vector<5x8xf32>
    %10 = tpu.matmul %8, %7, %cst_10 {dimension_numbers = #tpu.dot_dimension_numbers<[1], [0], [0], [1], [0, 0, 1, 1], [], []>} : vector<5x5xf32>, vector<5x8xf32>, vector<5x8xf32> -> vector<5x8xf32>
    %11 = vector.broadcast %9 : vector<5x1xf32> to vector<5x8xf32>
    %12 = arith.addf %10, %11 : vector<5x8xf32>
    %cst_11 = arith.constant 0.000000e+00 : f32
    %13 = vector.broadcast %cst_11 : f32 to vector<5x8xf32>
    %14 = arith.maximumf %12, %13 : vector<5x8xf32>
    %c0_12 = arith.constant 0 : index
    %c0_13 = arith.constant 0 : index
    %15 = vector.load %arg6[%c0_12, %c0_13] : memref<10x5xf32, #tpu.memory_space<vmem>>, vector<10x5xf32>
    %c0_14 = arith.constant 0 : index
    %c0_15 = arith.constant 0 : index
    %16 = vector.load %arg7[%c0_14, %c0_15] : memref<10x1xf32, #tpu.memory_space<vmem>>, vector<10x1xf32>
    %c0_16 = arith.constant 0 : index
    %c0_17 = arith.constant 0 : index
    %17 = vector.load %arg8[%c0_16, %c0_17] : memref<1x5xf32, #tpu.memory_space<vmem>>, vector<1x5xf32>
    %c0_18 = arith.constant 0 : index
    %c0_19 = arith.constant 0 : index
    %18 = vector.load %arg9[%c0_18, %c0_19] : memref<1x1xf32, #tpu.memory_space<vmem>>, vector<1x1xf32>
    %cst_20 = arith.constant dense<0.000000e+00> : vector<10x8xf32>
    %19 = tpu.matmul %15, %14, %cst_20 {dimension_numbers = #tpu.dot_dimension_numbers<[1], [0], [0], [1], [0, 0, 1, 1], [], []>} : vector<10x5xf32>, vector<5x8xf32>, vector<10x8xf32> -> vector<10x8xf32>
    %20 = vector.broadcast %16 : vector<10x1xf32> to vector<10x8xf32>
    %21 = arith.addf %19, %20 : vector<10x8xf32>
    %c0_21 = arith.constant 0 : index
    %c0_22 = arith.constant 0 : index
    %22 = vector.load %arg10[%c0_21, %c0_22] : memref<10x8xf32, #tpu.memory_space<vmem>>, vector<10x8xf32>
    tpu.vector_store %arg10[%c0_21, %c0_22], %21 {strides = array<i32>} : memref<10x8xf32, #tpu.memory_space<vmem>>, vector<10x8xf32>,
    %cst_23 = arith.constant dense<0.000000e+00> : vector<1x8xf32>
    %23 = tpu.matmul %17, %14, %cst_23 {dimension_numbers = #tpu.dot_dimension_numbers<[1], [0], [0], [1], [0, 0, 1, 1], [], []>} : vector<1x5xf32>, vector<5x8xf32>, vector<1x8xf32> -> vector<1x8xf32>
    %24 = vector.broadcast %18 : vector<1x1xf32> to vector<1x8xf32>
    %25 = arith.addf %23, %24 : vector<1x8xf32>
    %26 = arith.negf %25 : vector<1x8xf32>
    %27 = math.exp %26 : vector<1x8xf32>
    %cst_24 = arith.constant 1.000000e+00 : f32
    %28 = vector.broadcast %cst_24 : f32 to vector<1x8xf32>
    %29 = arith.addf %28, %27 : vector<1x8xf32>
    %30 = arith.divf %28, %29 : vector<1x8xf32>
    %cst_25 = arith.constant 1.000000e+00 : f32
    %31 = vector.broadcast %cst_25 : f32 to vector<1x8xf32>
    %32 = arith.mulf %30, %31 : vector<1x8xf32>
    %c0_26 = arith.constant 0 : index
    %c0_27 = arith.constant 0 : index
    %33 = vector.load %arg11[%c0_26, %c0_27] : memref<1x8xf32, #tpu.memory_space<vmem>>, vector<1x8xf32>
    tpu.vector_store %arg11[%c0_26, %c0_27], %32 {strides = array<i32>} : memref<1x8xf32, #tpu.memory_space<vmem>>, vector<1x8xf32>,
    return
  }
  func.func @transform_0(%arg0: i32) -> (i32, i32) {
    %c0_i32 = arith.constant 0 : i32
    %c0_i32_0 = arith.constant 0 : i32
    return %c0_i32, %arg0 : i32, i32
  }
  func.func @transform_1(%arg0: i32) -> (i32, i32) {
    %c0_i32 = arith.constant 0 : i32
    %c0_i32_0 = arith.constant 0 : i32
    %c0_i32_1 = arith.constant 0 : i32
    return %c0_i32, %c0_i32_0 : i32, i32
  }
  func.func @transform_2(%arg0: i32) -> (i32, i32) {
    %c0_i32 = arith.constant 0 : i32
    %c0_i32_0 = arith.constant 0 : i32
    %c0_i32_1 = arith.constant 0 : i32
    return %c0_i32, %c0_i32_0 : i32, i32
  }
  func.func @transform_3(%arg0: i32) -> (i32, i32) {
    %c0_i32 = arith.constant 0 : i32
    %c0_i32_0 = arith.constant 0 : i32
    %c0_i32_1 = arith.constant 0 : i32
    return %c0_i32, %c0_i32_0 : i32, i32
  }
  func.func @transform_4(%arg0: i32) -> (i32, i32) {
    %c0_i32 = arith.constant 0 : i32
    %c0_i32_0 = arith.constant 0 : i32
    %c0_i32_1 = arith.constant 0 : i32
    return %c0_i32, %c0_i32_0 : i32, i32
  }
  func.func @transform_5(%arg0: i32) -> (i32, i32) {
    %c0_i32 = arith.constant 0 : i32
    %c0_i32_0 = arith.constant 0 : i32
    %c0_i32_1 = arith.constant 0 : i32
    return %c0_i32, %c0_i32_0 : i32, i32
  }
  func.func @transform_6(%arg0: i32) -> (i32, i32) {
    %c0_i32 = arith.constant 0 : i32
    %c0_i32_0 = arith.constant 0 : i32
    %c0_i32_1 = arith.constant 0 : i32
    return %c0_i32, %c0_i32_0 : i32, i32
  }
  func.func @transform_7(%arg0: i32) -> (i32, i32) {
    %c0_i32 = arith.constant 0 : i32
    %c0_i32_0 = arith.constant 0 : i32
    %c0_i32_1 = arith.constant 0 : i32
    return %c0_i32, %c0_i32_0 : i32, i32
  }
  func.func @transform_8(%arg0: i32) -> (i32, i32) {
    %c0_i32 = arith.constant 0 : i32
    %c0_i32_0 = arith.constant 0 : i32
    %c0_i32_1 = arith.constant 0 : i32
    return %c0_i32, %c0_i32_0 : i32, i32
  }
  func.func @transform_9(%arg0: i32) -> (i32, i32) {
    %c0_i32 = arith.constant 0 : i32
    %c0_i32_0 = arith.constant 0 : i32
    return %c0_i32, %arg0 : i32, i32
  }
  func.func @transform_10(%arg0: i32) -> (i32, i32) {
    %c0_i32 = arith.constant 0 : i32
    %c0_i32_0 = arith.constant 0 : i32
    return %c0_i32, %arg0 : i32, i32
  }
}

</mosaic_0001>

<llo_original>
// kernel: tpu_custom_call.1
$region0: #{tpu_custom_call.1}
  #allocation0 [shape = 'u32[]', space=smem, size = 0x4, offset = 0x4, fixed_abs, tag = 'smem constant byte address 0x4 - core index']
  #allocation1 [shape = 'u32[144,128]{1,0:T(1,128)}', space=vmem, size = 0x12000, scoped, tag = 'internal scratch']
  #allocation2 [shape = 'f32[1,1]{1,0:T(1,128)S(1)}', space=vmem, size = 0x200, scoped, tag = 'scoped memory for tpu_custom_call.1']
  %s0 = inlined_call_operand.vmem [shape: f32[10,8], index: 0, kind: input, shape index: {}]
  %s1 = inlined_call_operand.vmem [shape: f32[5,10], index: 1, kind: input, shape index: {}]
  %s2 = inlined_call_operand.vmem [shape: f32[5,1], index: 2, kind: input, shape index: {}]
  %s3 = inlined_call_operand.vmem [shape: f32[5,5], index: 3, kind: input, shape index: {}]
  %s4 = inlined_call_operand.vmem [shape: f32[5,1], index: 4, kind: input, shape index: {}]
  %s5 = inlined_call_operand.vmem [shape: f32[10,5], index: 5, kind: input, shape index: {}]
  %s6 = inlined_call_operand.vmem [shape: f32[10,1], index: 6, kind: input, shape index: {}]
  %s7 = inlined_call_operand.vmem [shape: f32[1,5], index: 7, kind: input, shape index: {}]
  %s8 = inlined_call_operand.<no memory space> [shape: f32[1,1], index: 8, kind: input, shape index: {}]
  %s9 = inlined_call_operand.vmem [shape: f32[10,8], index: 9, kind: output, shape index: {0}]
  %s10 = inlined_call_operand.hbm [shape: f32[1,8], index: 10, kind: output, shape index: {1}]
  %11 = xla_tuple %s9, %s10
  %s12 = sld [smem:[#allocation0]]
  $region54: #{tpu_custom_call.1} parent=0
    _
  %s14 = ssub.s32 1, %s12
  %s15 = scalar_select 0, %s14, %s12
  %v16 = vstv %s8
  %17 = vst [vmem:[#allocation2] sm:$0x1] %v16
  $region1: #{tpu_custom_call.1} parent=0
    #allocation3 [shape = 'u8[512]{0}', space=vmem, size = 0x400, scoped, tag = 'output window, operand 1, single buffered']
    #allocation4 [shape = 's32[1]{0}', space=sflag, size = 0x4, scoped, tag = 'scoped memory for tpu_custom_call.1']
    %18 = vsyncpa [#allocation4], 0
    // Predicated region
    $region2: #{tpu_custom_call.1} parent=1 // pred_check
      _
    $region3: #{tpu_custom_call.1} parent=1 // pred_check_branch
      %20 = sbr.rel (0) target = $region5
    $region4: #{tpu_custom_call.1} parent=1 // pred_region
      _
    $region5: #{tpu_custom_call.1} parent=1 // pred_fallthru
      _
    // Predicated region
    $region6: #{tpu_custom_call.1} parent=1 // pred_check
      _
    $region7: #{tpu_custom_call.1} parent=1 // pred_check_branch
      %22 = sbr.rel (0) target = $region9
    $region8: #{tpu_custom_call.1} parent=1 // pred_region
      _
    $region9: #{tpu_custom_call.1} parent=1 // pred_fallthru
      _
    // Predicated region
    $region10: #{tpu_custom_call.1} parent=1 // pred_check
      _
    $region11: #{tpu_custom_call.1} parent=1 // pred_check_branch
      %24 = sbr.rel (0) target = $region13
    $region12: #{tpu_custom_call.1} parent=1 // pred_region
      _
    $region13: #{tpu_custom_call.1} parent=1 // pred_fallthru
      _
    // Predicated region
    $region14: #{tpu_custom_call.1} parent=1 // pred_check
      _
    $region15: #{tpu_custom_call.1} parent=1 // pred_check_branch
      %26 = sbr.rel (0) target = $region17
    $region16: #{tpu_custom_call.1} parent=1 // pred_region
      _
    $region17: #{tpu_custom_call.1} parent=1 // pred_fallthru
      _
    // Predicated region
    $region18: #{tpu_custom_call.1} parent=1 // pred_check
      _
    $region19: #{tpu_custom_call.1} parent=1 // pred_check_branch
      %28 = sbr.rel (0) target = $region21
    $region20: #{tpu_custom_call.1} parent=1 // pred_region
      _
    $region21: #{tpu_custom_call.1} parent=1 // pred_fallthru
      _
    // Predicated region
    $region22: #{tpu_custom_call.1} parent=1 // pred_check
      _
    $region23: #{tpu_custom_call.1} parent=1 // pred_check_branch
      %30 = sbr.rel (0) target = $region25
    $region24: #{tpu_custom_call.1} parent=1 // pred_region
      _
    $region25: #{tpu_custom_call.1} parent=1 // pred_fallthru
      _
    // Predicated region
    $region26: #{tpu_custom_call.1} parent=1 // pred_check
      _
    $region27: #{tpu_custom_call.1} parent=1 // pred_check_branch
      %32 = sbr.rel (0) target = $region29
    $region28: #{tpu_custom_call.1} parent=1 // pred_region
      _
    $region29: #{tpu_custom_call.1} parent=1 // pred_fallthru
      _
    // Predicated region
    $region30: #{tpu_custom_call.1} parent=1 // pred_check
      _
    $region31: #{tpu_custom_call.1} parent=1 // pred_check_branch
      %34 = sbr.rel (0) target = $region33
    $region32: #{tpu_custom_call.1} parent=1 // pred_region
      _
    $region33: #{tpu_custom_call.1} parent=1 // pred_fallthru
      _
    // Predicated region
    $region34: #{tpu_custom_call.1} parent=1 // pred_check
      _
    $region35: #{tpu_custom_call.1} parent=1 // pred_check_branch
      %36 = sbr.rel (0) target = $region37
    $region36: #{tpu_custom_call.1} parent=1 // pred_region
      _
    $region37: #{tpu_custom_call.1} parent=1 // pred_fallthru
      _
    %v37 = vld [vmem:[%s0] sm:$0xff]
    %v38 = vld [vmem:[%s0 + $0x8] sm:$0x3]
    %v39 = vld [vmem:[%s1] sm:$0x1f]
    %v40 = vld [vmem:[%s2] sm:$0x1f]
    %42 = vset.pattern.permute.xlu0 0
    %43 = vperm.xlu0 %42, %v40
    %v44 = vpop.permute.xlu0 %43
    %vm46 = vcmask 80896
    %v48 = vsel %vm46, %v39, 0
    %vm50 = vcmask 1041408
    %v52 = vsel %vm50, %v38, 0
    %54 = vmatprep.subr.mxu0 0.0
    %55 = vmatpush1.msra.mxu0 0.0
    %56 = vmatprep.subr.mxu0 0.0
    %57 = vmatpush1.msra.mxu0 0.0
    %58 = vmatprep.subr.mxu0 0.0
    %59 = vmatpush1.msra.mxu0 0.0
    %60 = vmatprep.subr.mxu0 0.0
    %61 = vmatpush1.msra.mxu0 0.0
    %62 = vmatprep.subr.mxu0 0.0
    %63 = vmatpush1.msra.mxu0 0.0
    %64 = vmatprep.subr.mxu0 0.0
    %65 = vmatpush1.msra.mxu0 0.0
    %66 = vmatprep.subr.mxu0 0.0
    %67 = vmatpush1.msra.mxu0 0.0
    %68 = vmatprep.subr.mxu0 0.0
    %69 = vmatpush1.msra.mxu0 0.0
    %70 = vmatprep.subr.mxu0 0.0
    %71 = vmatpush1.msra.mxu0 0.0
    %72 = vmatprep.subr.mxu0 0.0
    %73 = vmatpush1.msra.mxu0 0.0
    %74 = vmatprep.subr.mxu0 0.0
    %75 = vmatpush1.msra.mxu0 0.0
    %76 = vmatprep.subr.mxu0 0.0
    %77 = vmatpush1.msra.mxu0 0.0
    %78 = vmatprep.subr.mxu0 0.0
    %79 = vmatpush1.msra.mxu0 0.0
    %80 = vmatprep.subr.mxu0 0.0
    %81 = vmatpush1.msra.mxu0 0.0
    %82 = vmatprep.subr.mxu0 0.0
    %83 = vmatpush1.msra.mxu0 %v52
    %84 = vmatprep.subr.mxu0 0.0
    %85 = vmatpush1.msra.mxu0 %v37
    %86 = vmatprep.subr.mxu0 0.0
    %87 = vmatpush2.msra.mxu0 0.0
    %88 = vmatprep.subr.mxu0 0.0
    %89 = vmatpush2.msra.mxu0 0.0
    %90 = vmatprep.subr.mxu0 0.0
    %91 = vmatpush2.msra.mxu0 0.0
    %92 = vmatprep.subr.mxu0 0.0
    %93 = vmatpush2.msra.mxu0 0.0
    %94 = vmatprep.subr.mxu0 0.0
    %95 = vmatpush2.msra.mxu0 0.0
    %96 = vmatprep.subr.mxu0 0.0
    %97 = vmatpush2.msra.mxu0 0.0
    %98 = vmatprep.subr.mxu0 0.0
    %99 = vmatpush2.msra.mxu0 0.0
    %100 = vmatprep.subr.mxu0 0.0
    %101 = vmatpush2.msra.mxu0 0.0
    %102 = vmatprep.subr.mxu0 0.0
    %103 = vmatpush2.msra.mxu0 0.0
    %104 = vmatprep.subr.mxu0 0.0
    %105 = vmatpush2.msra.mxu0 0.0
    %106 = vmatprep.subr.mxu0 0.0
    %107 = vmatpush2.msra.mxu0 0.0
    %108 = vmatprep.subr.mxu0 0.0
    %109 = vmatpush2.msra.mxu0 0.0
    %110 = vmatprep.subr.mxu0 0.0
    %111 = vmatpush2.msra.mxu0 0.0
    %112 = vmatprep.subr.mxu0 0.0
    %113 = vmatpush2.msra.mxu0 0.0
    %114 = vmatprep.subr.mxu0 0.0
    %115 = vmatpush2.msra.mxu0 0.0
    %116 = vmatprep.subr.mxu0 0.0
    %117 = vmatpush2.msra.mxu0 0.0
    %118 = vmatprep.mubr.f32.mxu0 0.0
    %119 = vmatmul.mubr.f32.gmra.mxu0 %v48
    %v120 = vpop.f32.mrf.mxu0
    %v121 = vadd.f32 %v44, %v120
    %v122 = vpop.f32.mrf.mxu0
    %123 = vdwg.mxu0
    %v124 = vmax.f32 %v121, 0.0
    %v125 = vld [vmem:[%s3] sm:$0x1f]
    %v126 = vld [vmem:[%s4] sm:$0x1f]
    %128 = vset.pattern.permute.xlu0 0
    %129 = vperm.xlu0 %128, %v126
    %v130 = vpop.permute.xlu0 %129
    %vm132 = vcmask 39936
    %v134 = vsel %vm132, %v125, 0
    %vm136 = vcmask 1044480
    %v138 = vsel %vm136, %v124, 0
    %140 = vmatprep.subr.mxu0 0.0
    %141 = vmatpush1.msra.mxu0 0.0
    %142 = vmatprep.subr.mxu0 0.0
    %143 = vmatpush1.msra.mxu0 0.0
    %144 = vmatprep.subr.mxu0 0.0
    %145 = vmatpush1.msra.mxu0 0.0
    %146 = vmatprep.subr.mxu0 0.0
    %147 = vmatpush1.msra.mxu0 0.0
    %148 = vmatprep.subr.mxu0 0.0
    %149 = vmatpush1.msra.mxu0 0.0
    %150 = vmatprep.subr.mxu0 0.0
    %151 = vmatpush1.msra.mxu0 0.0
    %152 = vmatprep.subr.mxu0 0.0
    %153 = vmatpush1.msra.mxu0 0.0
    %154 = vmatprep.subr.mxu0 0.0
    %155 = vmatpush1.msra.mxu0 0.0
    %156 = vmatprep.subr.mxu0 0.0
    %157 = vmatpush1.msra.mxu0 0.0
    %158 = vmatprep.subr.mxu0 0.0
    %159 = vmatpush1.msra.mxu0 0.0
    %160 = vmatprep.subr.mxu0 0.0
    %161 = vmatpush1.msra.mxu0 0.0
    %162 = vmatprep.subr.mxu0 0.0
    %163 = vmatpush1.msra.mxu0 0.0
    %164 = vmatprep.subr.mxu0 0.0
    %165 = vmatpush1.msra.mxu0 0.0
    %166 = vmatprep.subr.mxu0 0.0
    %167 = vmatpush1.msra.mxu0 0.0
    %168 = vmatprep.subr.mxu0 0.0
    %169 = vmatpush1.msra.mxu0 0.0
    %170 = vmatprep.subr.mxu0 0.0
    %171 = vmatpush1.msra.mxu0 %v138
    %172 = vmatprep.subr.mxu0 0.0
    %173 = vmatpush2.msra.mxu0 0.0
    %174 = vmatprep.subr.mxu0 0.0
    %175 = vmatpush2.msra.mxu0 0.0
    %176 = vmatprep.subr.mxu0 0.0
    %177 = vmatpush2.msra.mxu0 0.0
    %178 = vmatprep.subr.mxu0 0.0
    %179 = vmatpush2.msra.mxu0 0.0
    %180 = vmatprep.subr.mxu0 0.0
    %181 = vmatpush2.msra.mxu0 0.0
    %182 = vmatprep.subr.mxu0 0.0
    %183 = vmatpush2.msra.mxu0 0.0
    %184 = vmatprep.subr.mxu0 0.0
    %185 = vmatpush2.msra.mxu0 0.0
    %186 = vmatprep.subr.mxu0 0.0
    %187 = vmatpush2.msra.mxu0 0.0
    %188 = vmatprep.subr.mxu0 0.0
    %189 = vmatpush2.msra.mxu0 0.0
    %190 = vmatprep.subr.mxu0 0.0
    %191 = vmatpush2.msra.mxu0 0.0
    %192 = vmatprep.subr.mxu0 0.0
    %193 = vmatpush2.msra.mxu0 0.0
    %194 = vmatprep.subr.mxu0 0.0
    %195 = vmatpush2.msra.mxu0 0.0
    %196 = vmatprep.subr.mxu0 0.0
    %197 = vmatpush2.msra.mxu0 0.0
    %198 = vmatprep.subr.mxu0 0.0
    %199 = vmatpush2.msra.mxu0 0.0
    %200 = vmatprep.subr.mxu0 0.0
    %201 = vmatpush2.msra.mxu0 0.0
    %202 = vmatprep.subr.mxu0 0.0
    %203 = vmatpush2.msra.mxu0 0.0
    %204 = vmatprep.mubr.f32.mxu0 0.0
    %205 = vmatmul.mubr.f32.gmra.mxu0 %v134
    %v206 = vpop.f32.mrf.mxu0
    %v207 = vadd.f32 %v130, %v206
    %v208 = vpop.f32.mrf.mxu0
    %209 = vdwg.mxu0
    %v210 = vmax.f32 %v207, 0.0
    %v211 = vld [vmem:[%s5] sm:$0xff]
    %v212 = vld [vmem:[%s5 + $0x8] sm:$0x3]
    %v213 = vld [vmem:[%s6] sm:$0xff]
    %v214 = vld [vmem:[%s6 + $0x8] sm:$0x3]
    %v215 = vld [vmem:[%s7] sm:$0x1]
    %v216 = vld [vmem:[#allocation2] sm:$0x1]
    %218 = vset.pattern.permute.xlu0 0
    %219 = vperm.xlu0 %218, %v213
    %v220 = vpop.permute.xlu0 %219
    %223 = vset.pattern.permute.xlu0 0
    %224 = vperm.xlu0 %223, %v214
    %v225 = vpop.permute.xlu0 %224
    %v228 = vsel %vm132, %v211, 0
    %v231 = vsel %vm132, %v212, 0
    %v234 = vsel %vm136, %v210, 0
    %236 = vmatprep.subr.mxu0 0.0
    %237 = vmatpush1.msra.mxu0 0.0
    %238 = vmatprep.subr.mxu0 0.0
    %239 = vmatpush1.msra.mxu0 0.0
    %240 = vmatprep.subr.mxu0 0.0
    %241 = vmatpush1.msra.mxu0 0.0
    %242 = vmatprep.subr.mxu0 0.0
    %243 = vmatpush1.msra.mxu0 0.0
    %244 = vmatprep.subr.mxu0 0.0
    %245 = vmatpush1.msra.mxu0 0.0
    %246 = vmatprep.subr.mxu0 0.0
    %247 = vmatpush1.msra.mxu0 0.0
    %248 = vmatprep.subr.mxu0 0.0
    %249 = vmatpush1.msra.mxu0 0.0
    %250 = vmatprep.subr.mxu0 0.0
    %251 = vmatpush1.msra.mxu0 0.0
    %252 = vmatprep.subr.mxu0 0.0
    %253 = vmatpush1.msra.mxu0 0.0
    %254 = vmatprep.subr.mxu0 0.0
    %255 = vmatpush1.msra.mxu0 0.0
    %256 = vmatprep.subr.mxu0 0.0
    %257 = vmatpush1.msra.mxu0 0.0
    %258 = vmatprep.subr.mxu0 0.0
    %259 = vmatpush1.msra.mxu0 0.0
    %260 = vmatprep.subr.mxu0 0.0
    %261 = vmatpush1.msra.mxu0 0.0
    %262 = vmatprep.subr.mxu0 0.0
    %263 = vmatpush1.msra.mxu0 0.0
    %264 = vmatprep.subr.mxu0 0.0
    %265 = vmatpush1.msra.mxu0 0.0
    %266 = vmatprep.subr.mxu0 0.0
    %267 = vmatpush1.msra.mxu0 %v234
    %268 = vmatprep.subr.mxu0 0.0
    %269 = vmatpush2.msra.mxu0 0.0
    %270 = vmatprep.subr.mxu0 0.0
    %271 = vmatpush2.msra.mxu0 0.0
    %272 = vmatprep.subr.mxu0 0.0
    %273 = vmatpush2.msra.mxu0 0.0
    %274 = vmatprep.subr.mxu0 0.0
    %275 = vmatpush2.msra.mxu0 0.0
    %276 = vmatprep.subr.mxu0 0.0
    %277 = vmatpush2.msra.mxu0 0.0
    %278 = vmatprep.subr.mxu0 0.0
    %279 = vmatpush2.msra.mxu0 0.0
    %280 = vmatprep.subr.mxu0 0.0
    %281 = vmatpush2.msra.mxu0 0.0
    %282 = vmatprep.subr.mxu0 0.0
    %283 = vmatpush2.msra.mxu0 0.0
    %284 = vmatprep.subr.mxu0 0.0
    %285 = vmatpush2.msra.mxu0 0.0
    %286 = vmatprep.subr.mxu0 0.0
    %287 = vmatpush2.msra.mxu0 0.0
    %288 = vmatprep.subr.mxu0 0.0
    %289 = vmatpush2.msra.mxu0 0.0
    %290 = vmatprep.subr.mxu0 0.0
    %291 = vmatpush2.msra.mxu0 0.0
    %292 = vmatprep.subr.mxu0 0.0
    %293 = vmatpush2.msra.mxu0 0.0
    %294 = vmatprep.subr.mxu0 0.0
    %295 = vmatpush2.msra.mxu0 0.0
    %296 = vmatprep.subr.mxu0 0.0
    %297 = vmatpush2.msra.mxu0 0.0
    %298 = vmatprep.subr.mxu0 0.0
    %299 = vmatpush2.msra.mxu0 0.0
    %300 = vmatprep.mubr.f32.mxu0 0.0
    %301 = vmatmul.mubr.f32.gmra.mxu0 %v228
    %v302 = vpop.f32.mrf.mxu0
    %v303 = vadd.f32 %v220, %v302
    %v304 = vpop.f32.mrf.mxu0
    %305 = vmatprep.mubr.f32.mxu0 0.0
    %306 = vmatmul.mubr.f32.gmra.mxu0 %v231
    %v307 = vpop.f32.mrf.mxu0
    %v308 = vadd.f32 %v225, %v307
    %v309 = vpop.f32.mrf.mxu0
    %310 = vdwg.mxu0
    %vm311 = vcmask 64512
    %312 = vst.msk [vmem:[%s9] sm:$0xff] %vm311, %v303
    %vm313 = vcmask 58368
    %314 = vst.msk [vmem:[%s9 + $0x8] sm:$0x3] %vm313, %v308
    %316 = vset.pattern.permute.xlu0 0
    %317 = vperm.xlu0 %316, %v216
    %v318 = vpop.permute.xlu0 %317
    %v320 = vlaneseq
    %v321 = vshrl.u32 %v320, 7
    %v322 = vsub.s32 0, %v321
    %v323 = vrot.slane %v318, %v322
    %v325 = vsel %vm132, %v215, 0
    %327 = vmatprep.subr.mxu0 0.0
    %328 = vmatpush1.msra.mxu0 0.0
    %329 = vmatprep.subr.mxu0 0.0
    %330 = vmatpush1.msra.mxu0 0.0
    %331 = vmatprep.subr.mxu0 0.0
    %332 = vmatpush1.msra.mxu0 0.0
    %333 = vmatprep.subr.mxu0 0.0
    %334 = vmatpush1.msra.mxu0 0.0
    %335 = vmatprep.subr.mxu0 0.0
    %336 = vmatpush1.msra.mxu0 0.0
    %337 = vmatprep.subr.mxu0 0.0
    %338 = vmatpush1.msra.mxu0 0.0
    %339 = vmatprep.subr.mxu0 0.0
    %340 = vmatpush1.msra.mxu0 0.0
    %341 = vmatprep.subr.mxu0 0.0
    %342 = vmatpush1.msra.mxu0 0.0
    %343 = vmatprep.subr.mxu0 0.0
    %344 = vmatpush1.msra.mxu0 0.0
    %345 = vmatprep.subr.mxu0 0.0
    %346 = vmatpush1.msra.mxu0 0.0
    %347 = vmatprep.subr.mxu0 0.0
    %348 = vmatpush1.msra.mxu0 0.0
    %349 = vmatprep.subr.mxu0 0.0
    %350 = vmatpush1.msra.mxu0 0.0
    %351 = vmatprep.subr.mxu0 0.0
    %352 = vmatpush1.msra.mxu0 0.0
    %353 = vmatprep.subr.mxu0 0.0
    %354 = vmatpush1.msra.mxu0 0.0
    %355 = vmatprep.subr.mxu0 0.0
    %356 = vmatpush1.msra.mxu0 0.0
    %357 = vmatprep.subr.mxu0 0.0
    %358 = vmatpush1.msra.mxu0 %v234
    %359 = vmatprep.subr.mxu0 0.0
    %360 = vmatpush2.msra.mxu0 0.0
    %361 = vmatprep.subr.mxu0 0.0
    %362 = vmatpush2.msra.mxu0 0.0
    %363 = vmatprep.subr.mxu0 0.0
    %364 = vmatpush2.msra.mxu0 0.0
    %365 = vmatprep.subr.mxu0 0.0
    %366 = vmatpush2.msra.mxu0 0.0
    %367 = vmatprep.subr.mxu0 0.0
    %368 = vmatpush2.msra.mxu0 0.0
    %369 = vmatprep.subr.mxu0 0.0
    %370 = vmatpush2.msra.mxu0 0.0
    %371 = vmatprep.subr.mxu0 0.0
    %372 = vmatpush2.msra.mxu0 0.0
    %373 = vmatprep.subr.mxu0 0.0
    %374 = vmatpush2.msra.mxu0 0.0
    %375 = vmatprep.subr.mxu0 0.0
    %376 = vmatpush2.msra.mxu0 0.0
    %377 = vmatprep.subr.mxu0 0.0
    %378 = vmatpush2.msra.mxu0 0.0
    %379 = vmatprep.subr.mxu0 0.0
    %380 = vmatpush2.msra.mxu0 0.0
    %381 = vmatprep.subr.mxu0 0.0
    %382 = vmatpush2.msra.mxu0 0.0
    %383 = vmatprep.subr.mxu0 0.0
    %384 = vmatpush2.msra.mxu0 0.0
    %385 = vmatprep.subr.mxu0 0.0
    %386 = vmatpush2.msra.mxu0 0.0
    %387 = vmatprep.subr.mxu0 0.0
    %388 = vmatpush2.msra.mxu0 0.0
    %389 = vmatprep.subr.mxu0 0.0
    %390 = vmatpush2.msra.mxu0 0.0
    %391 = vmatprep.mubr.f32.mxu0 0.0
    %392 = vmatmul.mubr.f32.gmra.mxu0 %v325
    %v393 = vpop.f32.mrf.mxu0
    %v394 = vadd.f32 %v323, %v393
    %v395 = vpop.f32.mrf.mxu0
    %396 = vdwg.mxu0
    %v397 = vxor.u32 %v394, 2147483648
    %v398 = vmul.f32 %v397, 1.442695
    %v399 = vpow.pop %v398
    %v400 = vadd.f32 %v399, 1.0
    %v401 = vrcp.pop %v400
    %v402 = vmul.f32 1.0, %v401
    %vm403 = vcmask 57344
    %404 = vst.msk [vmem:[#allocation3] sm:$0x1] %vm403, %v402
    // Predicated region
    $region38: #{tpu_custom_call.1} parent=1 // pred_check
      _
    $region39: #{tpu_custom_call.1} parent=1 // pred_check_branch
      %406 = sbr.rel (0) target = $region41
    $region40: #{tpu_custom_call.1} parent=1 // pred_region
      _
    $region41: #{tpu_custom_call.1} parent=1 // pred_fallthru
      _
    // Predicated region
    $region42: #{tpu_custom_call.1} parent=1 // pred_check
      _
    $region43: #{tpu_custom_call.1} parent=1 // pred_check_branch
      %408 = sbr.rel (0) target = $region45
    $region44: #{tpu_custom_call.1} parent=1 // pred_region
      %s410 = ssub.s32 16, 16
      %411 = vsyncadd [#allocation4], %s410
      %s413 = sshll.u32 [#allocation3], 4
      %s414 = int_to_ptr.vmem [resolvable:$true] %s413
      %416 = dma.vmem_to_hbm [thread:$0]  %s414, 16, %s10, [#allocation4]
    $region45: #{tpu_custom_call.1} parent=1 // pred_fallthru
      _
    // Predicated region
    $region46: #{tpu_custom_call.1} parent=1 // pred_check
      _
    $region47: #{tpu_custom_call.1} parent=1 // pred_check_branch
      %418 = sbr.rel (0) target = $region49
    $region48: #{tpu_custom_call.1} parent=1 // pred_region
      _
    $region49: #{tpu_custom_call.1} parent=1 // pred_fallthru
      _
    // Predicated region
    $region50: #{tpu_custom_call.1} parent=1 // pred_check
      _
    $region51: #{tpu_custom_call.1} parent=1 // pred_check_branch
      %420 = sbr.rel (0) target = $region53
    $region52: #{tpu_custom_call.1} parent=1 // pred_region
      %421 = dma.done [#allocation4], 16
    $region53: #{tpu_custom_call.1} parent=1 // pred_fallthru
      _
    %422 = vsyncpa [#allocation4], 1

</llo_original>
